<compile_context>
chip_gen: v7x
topology: tpu7x:2x2x1
jax: 0.10.0
libtpu: 0.0.40
codegen_flags: <defaults>
</compile_context>

<pallas_src>
import jax
import jax.numpy as jnp
from jax.experimental import pallas as pl
from jax.experimental.pallas import tpu as pltpu

NUM_REPRS = 6  # q_msg.view(B, 6, -1) in the reference module


def _user_dp_attn_kernel(q_ref, u_ref, o_ref):
    # q_ref: (TB, 6, D), u_ref: (TB, S, D), o_ref: (TB, 6, D)
    q = q_ref[...]                      # native dtype straight into the MXU
    u = u_ref[...]
    s_len = u.shape[1]

    # scores[b, i, s] = q[b, i, :] . u[b, s, :]  -- no transpose materialized
    scores = jnp.einsum("bqd,bsd->bqs", q, u,
                        preferred_element_type=jnp.float32)       # (TB, 6, S) f32

    # numerically-stable softmax numerator (f32)
    scores = scores - jnp.max(scores, axis=-1, keepdims=True)
    e = jnp.exp(scores)                                           # (TB, 6, S)
    # fold softmax normalization and the mean's 1/S; exact reciprocal on a
    # (TB, 6, 1) tensor is essentially free and tighter than approx EUP vrcp.
    inv = jnp.float32(1.0) / (jnp.sum(e, axis=-1, keepdims=True)
                              * jnp.float32(s_len))               # (TB, 6, 1)

    # (e @ u) * inv == mean_s( softmax(scores)[s] * u[s] )
    # TODO(synk): if bundle dumps show the MXU push/result-FIFO path binding
    # before HBM (likely on v7x / v5e for tiny M=6 matmuls), move this second
    # contraction to a VPU weighted-sum over the small S axis.
    w = jnp.einsum("bqs,bsd->bqd", e.astype(u.dtype), u,
                   preferred_element_type=jnp.float32)            # (TB, 6, D)

    # single full-block store: no per-head slicing, no sublane relayouts
    o_ref[...] = (w * inv).astype(o_ref.dtype)


def _round_up(x, m):
    return ((x + m - 1) // m) * m


def _sublane_pack(dtype):
    # sub-32-bit dtypes pack along sublanes: f32 -> 8, bf16 -> 16, int8/fp8 -> 32
    return 32 // jnp.dtype(dtype).itemsize


def _padded_tile_bytes(rows, cols, dtype):
    # VMEM lays out the trailing two block dims in (sublane_pack, 128) tiles.
    it = jnp.dtype(dtype).itemsize
    return _round_up(rows, _sublane_pack(dtype)) * _round_up(cols, 128) * it


def _tpu_vmem_budget():
    """Returns (per-step padded-tile budget, vmem_limit_bytes, multi_tensorcore)."""
    try:
        info = pltpu.get_tpu_info()
        cap = int(getattr(info, "vmem_capacity_bytes", 0)) or None
    except Exception:
        cap = None
    if cap is None:
        cap = 64 * 1024 * 1024            # conservative fallback: v7x-class VMEM
    if cap >= 100 * 1024 * 1024:          # v5e / v6e: 128 MiB VMEM, 1 TensorCore
        return 48 * 1024 * 1024, 64 * 1024 * 1024, False
    # v7x-class: 64 MiB VMEM per TensorCore, 2 TensorCores per chip
    return 24 * 1024 * 1024, 48 * 1024 * 1024, True


def _choose_tb(B, S, D, q_dtype, u_dtype, out_dtype, budget, multi_tc):
    f32 = jnp.float32
    per_b = (
        2 * _padded_tile_bytes(S, D, u_dtype)              # u tile, double-buffered
        + 2 * _padded_tile_bytes(NUM_REPRS, D, q_dtype)    # q tile, double-buffered
        + 2 * _padded_tile_bytes(NUM_REPRS, D, out_dtype)  # out tile, double-buffered
        + 2 * _padded_tile_bytes(NUM_REPRS, S, f32)        # scores + e (f32 temps)
        + _padded_tile_bytes(NUM_REPRS, D, f32)            # w (f32 temp)
    )
    tb = max(1, budget // per_b)
    if tb >= 8:
        tb = (tb // 8) * 8                # keep leading-dim DMA sizes tidy
    tb = min(tb, B)
    if multi_tc:
        # give both TensorCores a pipelined loop when the batch allows it
        while tb > 8 and pl.cdiv(B, tb) < 4:
            tb = max(8, ((tb // 2) // 8) * 8)
    return max(tb, 1)


def user_dot_product_attention(q_msg, user_features):
    """q_msg: (B, 6*D), user_features: (B, S, D) -> (B, 1, 6*D)."""
    B, QD = q_msg.shape
    _, S, D = user_features.shape
    assert QD == NUM_REPRS * D, "q_msg last dim must be 6 * feature dim"

    budget, vmem_limit, multi_tc = _tpu_vmem_budget()
    TB = _choose_tb(B, S, D, q_msg.dtype, user_features.dtype, q_msg.dtype,
                    budget, multi_tc)
    grid = (pl.cdiv(B, TB),)              # ragged tail handled by Pallas; no pad copy

    # TODO(synk): for very long S (per-example working set > budget even at
    # TB=1) add a second grid axis over S with an online-softmax accumulator
    # instead of collapsing TB.

    # (B, 6*D) -> (B, 6, D): same row-major bytes, effectively a bitcast.
    q = q_msg.reshape(B, NUM_REPRS, D)

    itemsize = jnp.dtype(user_features.dtype).itemsize
    cost = pl.CostEstimate(
        flops=4 * B * NUM_REPRS * S * D,
        transcendentals=B * NUM_REPRS * S,
        bytes_accessed=(B * S * D + 2 * B * NUM_REPRS * D) * itemsize,
    )

    out = pl.pallas_call(
        _user_dp_attn_kernel,
        out_shape=jax.ShapeDtypeStruct((B, NUM_REPRS, D), q_msg.dtype),
        grid_spec=pltpu.PrefetchScalarGridSpec(
            num_scalar_prefetch=0,
            grid=grid,
            in_specs=[
                pl.BlockSpec((TB, NUM_REPRS, D), lambda b: (b, 0, 0)),
                pl.BlockSpec((TB, S, D), lambda b: (b, 0, 0)),
            ],
            out_specs=pl.BlockSpec((TB, NUM_REPRS, D), lambda b: (b, 0, 0)),
        ),
        compiler_params=pltpu.CompilerParams(
            # TODO(synk): on v7x, verify "parallel" shards the batch grid across
            # both TensorCores; otherwise switch to pltpu.CORE_PARALLEL / core_map.
            dimension_semantics=("parallel",),
            vmem_limit_bytes=vmem_limit,
        ),
        cost_estimate=cost,
    )(q, user_features)

    # row-major (B, 6, D) -> (B, 1, 6*D) == torch.cat of six (B, 1, D) over dim 2
    return out.reshape(B, 1, NUM_REPRS * D)


if __name__ == "__main__":
    key = jax.random.PRNGKey(0)
    B, S, D = 2, 8, 32
    k1, k2 = jax.random.split(key)
    q_msg = jax.random.normal(k1, (B, NUM_REPRS * D), dtype=jnp.float32)
    user_features = jax.random.normal(k2, (B, S, D), dtype=jnp.float32)

    out = user_dot_product_attention(q_msg, user_features)
    out = jax.block_until_ready(out)

    # pure-JAX reference of the PyTorch forward
    qr = q_msg.reshape(B, NUM_REPRS, D)
    scores = jnp.einsum("bqd,bsd->bqs", qr, user_features)
    p = jax.nn.softmax(scores, axis=-1)
    ref = (jnp.einsum("bqs,bsd->bqd", p, user_features) / S).reshape(B, 1, NUM_REPRS * D)

    assert out.shape == (B, 1, NUM_REPRS * D)
    assert jnp.allclose(out, ref, atol=2e-3, rtol=2e-3), float(jnp.max(jnp.abs(out - ref)))
    print("KERNEL_OK")
</pallas_src>

<mosaic_0001>
module attributes {stable_mosaic.version = 11 : i64} {
  func.func @_user_dp_attn_kernel(%arg0: i32, %arg1: memref<2x6x32xf32, #tpu.memory_space<vmem>>, %arg2: memref<2x8x32xf32, #tpu.memory_space<vmem>>, %arg3: memref<2x6x32xf32, #tpu.memory_space<vmem>>) attributes {dimension_semantics = [#tpu.dimension_semantics<parallel>], iteration_bounds = array<i64: 1>, scalar_prefetch = 0 : i64, scratch_operands = 0 : i64, tpu.core_type = #tpu.core_type<tc>, window_params = [{transform_indices = @transform_0, window_bounds = array<i64: 2, 6, 32>}, {transform_indices = @transform_1, window_bounds = array<i64: 2, 8, 32>}, {transform_indices = @transform_2, window_bounds = array<i64: 2, 6, 32>}]} {
    %c0 = arith.constant 0 : index
    %c0_0 = arith.constant 0 : index
    %c0_1 = arith.constant 0 : index
    %0 = vector.load %arg1[%c0, %c0_0, %c0_1] : memref<2x6x32xf32, #tpu.memory_space<vmem>>, vector<2x6x32xf32>
    %c0_2 = arith.constant 0 : index
    %c0_3 = arith.constant 0 : index
    %c0_4 = arith.constant 0 : index
    %1 = vector.load %arg2[%c0_2, %c0_3, %c0_4] : memref<2x8x32xf32, #tpu.memory_space<vmem>>, vector<2x8x32xf32>
    "tpu.trace_start"() <{level = 10 : i32, message = "bqd,bsd->bqs"}> : () -> ()
    %cst = arith.constant dense<0.000000e+00> : vector<2x6x8xf32>
    %2 = tpu.matmul %0, %1, %cst {dimension_numbers = #tpu.dot_dimension_numbers<[2], [2], [1], [1], [0, 0, 0, 1, 1, 1], [0], [0]>} : vector<2x6x32xf32>, vector<2x8x32xf32>, vector<2x6x8xf32> -> vector<2x6x8xf32>
    "tpu.trace_stop"() : () -> ()
    %cst_5 = arith.constant dense<0xFF800000> : vector<2x6xf32>
    %3 = vector.multi_reduction <maximumf>, %2, %cst_5 [2] : vector<2x6x8xf32> to vector<2x6xf32>
    %4 = vector.shape_cast %3 : vector<2x6xf32> to vector<2x6x1xf32>
    %5 = vector.broadcast %4 : vector<2x6x1xf32> to vector<2x6x8xf32>
    %6 = arith.subf %2, %5 : vector<2x6x8xf32>
    %7 = math.exp %6 : vector<2x6x8xf32>
    %cst_6 = arith.constant dense<0.000000e+00> : vector<2x6xf32>
    %8 = vector.multi_reduction <add>, %7, %cst_6 [2] : vector<2x6x8xf32> to vector<2x6xf32>
    %9 = vector.shape_cast %8 : vector<2x6xf32> to vector<2x6x1xf32>
    %cst_7 = arith.constant 8.000000e+00 : f32
    %10 = vector.broadcast %cst_7 : f32 to vector<2x6x1xf32>
    %11 = arith.mulf %9, %10 : vector<2x6x1xf32>
    %cst_8 = arith.constant 1.000000e+00 : f32
    %12 = vector.broadcast %cst_8 : f32 to vector<2x6x1xf32>
    %13 = arith.divf %12, %11 : vector<2x6x1xf32>
    "tpu.trace_start"() <{level = 10 : i32, message = "bqs,bsd->bqd"}> : () -> ()
    %cst_9 = arith.constant dense<0.000000e+00> : vector<2x6x32xf32>
    %14 = tpu.matmul %7, %1, %cst_9 {dimension_numbers = #tpu.dot_dimension_numbers<[2], [1], [1], [2], [0, 0, 0, 1, 1, 2], [0], [0]>} : vector<2x6x8xf32>, vector<2x8x32xf32>, vector<2x6x32xf32> -> vector<2x6x32xf32>
    "tpu.trace_stop"() : () -> ()
    %15 = vector.broadcast %13 : vector<2x6x1xf32> to vector<2x6x32xf32>
    %16 = arith.mulf %14, %15 : vector<2x6x32xf32>
    %c0_10 = arith.constant 0 : index
    %c0_11 = arith.constant 0 : index
    %c0_12 = arith.constant 0 : index
    %17 = vector.load %arg3[%c0_10, %c0_11, %c0_12] : memref<2x6x32xf32, #tpu.memory_space<vmem>>, vector<2x6x32xf32>
    tpu.vector_store %arg3[%c0_10, %c0_11, %c0_12], %16 {strides = array<i32>} : memref<2x6x32xf32, #tpu.memory_space<vmem>>, vector<2x6x32xf32>,
    return
  }
  func.func @transform_0(%arg0: i32) -> (i32, i32, i32) {
    %c0_i32 = arith.constant 0 : i32
    %c0_i32_0 = arith.constant 0 : i32
    %c0_i32_1 = arith.constant 0 : i32
    return %arg0, %c0_i32, %c0_i32_0 : i32, i32, i32
  }
  func.func @transform_1(%arg0: i32) -> (i32, i32, i32) {
    %c0_i32 = arith.constant 0 : i32
    %c0_i32_0 = arith.constant 0 : i32
    %c0_i32_1 = arith.constant 0 : i32
    return %arg0, %c0_i32, %c0_i32_0 : i32, i32, i32
  }
  func.func @transform_2(%arg0: i32) -> (i32, i32, i32) {
    %c0_i32 = arith.constant 0 : i32
    %c0_i32_0 = arith.constant 0 : i32
    %c0_i32_1 = arith.constant 0 : i32
    return %arg0, %c0_i32, %c0_i32_0 : i32, i32, i32
  }
}

</mosaic_0001>

<llo_original>
// kernel: tpu_custom_call.1
$region0: #{tpu_custom_call.1}
  #allocation0 [shape = 'u32[]', space=smem, size = 0x4, offset = 0x4, fixed_abs, tag = 'smem constant byte address 0x4 - core index']
  #allocation1 [shape = 'u32[144,128]{1,0:T(1,128)}', space=vmem, size = 0x12000, scoped, tag = 'internal scratch']
  %s0 = inlined_call_operand.vmem [shape: f32[2,6,32], index: 0, kind: input, shape index: {}]
  %s1 = inlined_call_operand.vmem [shape: f32[2,8,32], index: 1, kind: input, shape index: {}]
  %s2 = inlined_call_operand.vmem [shape: f32[2,6,32], index: 2, kind: output, shape index: {}]
  %s3 = sld [smem:[#allocation0]]
  $region18: #{tpu_custom_call.1} parent=0
    _
  %s5 = ssub.s32 1, %s3
  %s6 = scalar_select 0, %s5, %s3
  // Predicated region
  $region2: #{tpu_custom_call.1} parent=0 // pred_check
    _
  $region3: #{tpu_custom_call.1} parent=0 // pred_check_branch
    %8 = sbr.rel (0) target = $region5
  $region4: #{tpu_custom_call.1} parent=0 // pred_region
    _
  $region5: #{tpu_custom_call.1} parent=0 // pred_fallthru
    _
  // Predicated region
  $region6: #{tpu_custom_call.1} parent=0 // pred_check
    _
  $region7: #{tpu_custom_call.1} parent=0 // pred_check_branch
    %10 = sbr.rel (0) target = $region9
  $region8: #{tpu_custom_call.1} parent=0 // pred_region
    _
  $region9: #{tpu_custom_call.1} parent=0 // pred_fallthru
    _
  %v11 = vld [vmem:[%s0] sm:$0x3f]
  %v12 = vld [vmem:[%s0 + $0x8] sm:$0x3f]
  %v13 = vld [vmem:[%s1] sm:$0xff]
  %v14 = vld [vmem:[%s1 + $0x8] sm:$0xff]
  %vm15 = vcmask 261120
  %v17 = vsel %vm15, %v11, 0
  %v20 = vsel %vm15, %v13, 0
  %22 = vmatprep.subr.mxu0 0.0
  %23 = vmatpush1.xpose.msra.mxu0 %v20
  %24 = vmatprep.subr.mxu0 0.0
  %25 = vmatpush1.xpose.msra.mxu0 0.0
  %26 = vmatprep.subr.mxu0 0.0
  %27 = vmatpush1.xpose.msra.mxu0 0.0
  %28 = vmatprep.subr.mxu0 0.0
  %29 = vmatpush1.xpose.msra.mxu0 0.0
  %30 = vmatprep.subr.mxu0 0.0
  %31 = vmatpush1.xpose.msra.mxu0 0.0
  %32 = vmatprep.subr.mxu0 0.0
  %33 = vmatpush1.xpose.msra.mxu0 0.0
  %34 = vmatprep.subr.mxu0 0.0
  %35 = vmatpush1.xpose.msra.mxu0 0.0
  %36 = vmatprep.subr.mxu0 0.0
  %37 = vmatpush1.xpose.msra.mxu0 0.0
  %38 = vmatprep.subr.mxu0 0.0
  %39 = vmatpush1.xpose.msra.mxu0 0.0
  %40 = vmatprep.subr.mxu0 0.0
  %41 = vmatpush1.xpose.msra.mxu0 0.0
  %42 = vmatprep.subr.mxu0 0.0
  %43 = vmatpush1.xpose.msra.mxu0 0.0
  %44 = vmatprep.subr.mxu0 0.0
  %45 = vmatpush1.xpose.msra.mxu0 0.0
  %46 = vmatprep.subr.mxu0 0.0
  %47 = vmatpush1.xpose.msra.mxu0 0.0
  %48 = vmatprep.subr.mxu0 0.0
  %49 = vmatpush1.xpose.msra.mxu0 0.0
  %50 = vmatprep.subr.mxu0 0.0
  %51 = vmatpush1.xpose.msra.mxu0 0.0
  %52 = vmatprep.subr.mxu0 0.0
  %53 = vmatpush1.xpose.msra.mxu0 0.0
  %54 = vmatprep.subr.mxu0 0.0
  %55 = vmatpush1.xpose.msra.mxu0 0.0
  %56 = vmatprep.subr.mxu0 0.0
  %57 = vmatpush1.xpose.msra.mxu0 0.0
  %58 = vmatprep.subr.mxu0 0.0
  %59 = vmatpush1.xpose.msra.mxu0 0.0
  %60 = vmatprep.subr.mxu0 0.0
  %61 = vmatpush1.xpose.msra.mxu0 0.0
  %62 = vmatprep.subr.mxu0 0.0
  %63 = vmatpush1.xpose.msra.mxu0 0.0
  %64 = vmatprep.subr.mxu0 0.0
  %65 = vmatpush1.xpose.msra.mxu0 0.0
  %66 = vmatprep.subr.mxu0 0.0
  %67 = vmatpush1.xpose.msra.mxu0 0.0
  %68 = vmatprep.subr.mxu0 0.0
  %69 = vmatpush1.xpose.msra.mxu0 0.0
  %70 = vmatprep.subr.mxu0 0.0
  %71 = vmatpush1.xpose.msra.mxu0 0.0
  %72 = vmatprep.subr.mxu0 0.0
  %73 = vmatpush1.xpose.msra.mxu0 0.0
  %74 = vmatprep.subr.mxu0 0.0
  %75 = vmatpush1.xpose.msra.mxu0 0.0
  %76 = vmatprep.subr.mxu0 0.0
  %77 = vmatpush1.xpose.msra.mxu0 0.0
  %78 = vmatprep.subr.mxu0 0.0
  %79 = vmatpush1.xpose.msra.mxu0 0.0
  %80 = vmatprep.subr.mxu0 0.0
  %81 = vmatpush1.xpose.msra.mxu0 0.0
  %82 = vmatprep.subr.mxu0 0.0
  %83 = vmatpush1.xpose.msra.mxu0 0.0
  %84 = vmatprep.subr.mxu0 0.0
  %85 = vmatpush1.xpose.msra.mxu0 0.0
  %86 = vmatprep.mubr.f32.mxu0 0.0
  %87 = vmatmul.mubr.f32.gmra.mrb[0].mxu0 %v17
  %v88 = vpop.f32.mrb[0].mxu0
  %v89 = vadd.f32 0.0, %v88
  %v90 = vpop.f32.mrb[0].mxu0
  %91 = vdwg.mxu0
  %v93 = vsel %vm15, %v12, 0
  %v96 = vsel %vm15, %v14, 0
  %98 = vmatprep.subr.mxu0 0.0
  %99 = vmatpush1.xpose.msra.mxu0 %v96
  %100 = vmatprep.subr.mxu0 0.0
  %101 = vmatpush1.xpose.msra.mxu0 0.0
  %102 = vmatprep.subr.mxu0 0.0
  %103 = vmatpush1.xpose.msra.mxu0 0.0
  %104 = vmatprep.subr.mxu0 0.0
  %105 = vmatpush1.xpose.msra.mxu0 0.0
  %106 = vmatprep.subr.mxu0 0.0
  %107 = vmatpush1.xpose.msra.mxu0 0.0
  %108 = vmatprep.subr.mxu0 0.0
  %109 = vmatpush1.xpose.msra.mxu0 0.0
  %110 = vmatprep.subr.mxu0 0.0
  %111 = vmatpush1.xpose.msra.mxu0 0.0
  %112 = vmatprep.subr.mxu0 0.0
  %113 = vmatpush1.xpose.msra.mxu0 0.0
  %114 = vmatprep.subr.mxu0 0.0
  %115 = vmatpush1.xpose.msra.mxu0 0.0
  %116 = vmatprep.subr.mxu0 0.0
  %117 = vmatpush1.xpose.msra.mxu0 0.0
  %118 = vmatprep.subr.mxu0 0.0
  %119 = vmatpush1.xpose.msra.mxu0 0.0
  %120 = vmatprep.subr.mxu0 0.0
  %121 = vmatpush1.xpose.msra.mxu0 0.0
  %122 = vmatprep.subr.mxu0 0.0
  %123 = vmatpush1.xpose.msra.mxu0 0.0
  %124 = vmatprep.subr.mxu0 0.0
  %125 = vmatpush1.xpose.msra.mxu0 0.0
  %126 = vmatprep.subr.mxu0 0.0
  %127 = vmatpush1.xpose.msra.mxu0 0.0
  %128 = vmatprep.subr.mxu0 0.0
  %129 = vmatpush1.xpose.msra.mxu0 0.0
  %130 = vmatprep.subr.mxu0 0.0
  %131 = vmatpush1.xpose.msra.mxu0 0.0
  %132 = vmatprep.subr.mxu0 0.0
  %133 = vmatpush1.xpose.msra.mxu0 0.0
  %134 = vmatprep.subr.mxu0 0.0
  %135 = vmatpush1.xpose.msra.mxu0 0.0
  %136 = vmatprep.subr.mxu0 0.0
  %137 = vmatpush1.xpose.msra.mxu0 0.0
  %138 = vmatprep.subr.mxu0 0.0
  %139 = vmatpush1.xpose.msra.mxu0 0.0
  %140 = vmatprep.subr.mxu0 0.0
  %141 = vmatpush1.xpose.msra.mxu0 0.0
  %142 = vmatprep.subr.mxu0 0.0
  %143 = vmatpush1.xpose.msra.mxu0 0.0
  %144 = vmatprep.subr.mxu0 0.0
  %145 = vmatpush1.xpose.msra.mxu0 0.0
  %146 = vmatprep.subr.mxu0 0.0
  %147 = vmatpush1.xpose.msra.mxu0 0.0
  %148 = vmatprep.subr.mxu0 0.0
  %149 = vmatpush1.xpose.msra.mxu0 0.0
  %150 = vmatprep.subr.mxu0 0.0
  %151 = vmatpush1.xpose.msra.mxu0 0.0
  %152 = vmatprep.subr.mxu0 0.0
  %153 = vmatpush1.xpose.msra.mxu0 0.0
  %154 = vmatprep.subr.mxu0 0.0
  %155 = vmatpush1.xpose.msra.mxu0 0.0
  %156 = vmatprep.subr.mxu0 0.0
  %157 = vmatpush1.xpose.msra.mxu0 0.0
  %158 = vmatprep.subr.mxu0 0.0
  %159 = vmatpush1.xpose.msra.mxu0 0.0
  %160 = vmatprep.subr.mxu0 0.0
  %161 = vmatpush1.xpose.msra.mxu0 0.0
  %162 = vmatprep.mubr.f32.mxu0 0.0
  %163 = vmatmul.mubr.f32.gmra.mrb[0].mxu0 %v93
  %v164 = vpop.f32.mrb[0].mxu0
  %v165 = vadd.f32 0.0, %v164
  %v166 = vpop.f32.mrb[0].mxu0
  %167 = vdwg.mxu0
  %vm168 = vcmask 62464
  %v169 = vsel %vm168, %v89, -inf
  %170 = vmax.xlane.f32.xlu0 %v169
  %v171 = vpop.xlane.xlu0 %170
  %v172 = vsel %vm168, %v165, -inf
  %173 = vmax.xlane.f32.xlu0 %v172
  %v174 = vpop.xlane.xlu0 %173
  %v175 = vsub.f32 %v89, %v171
  %v176 = vsub.f32 %v165, %v174
  %v177 = vmul.f32 %v175, 1.442695
  %v178 = vpow.pop %v177
  %v179 = vmul.f32 %v176, 1.442695
  %v180 = vpow.pop %v179
  %v181 = vsel %vm168, %v178, 0.0
  %182 = vadd.xlane.f32.xlu0 %v181
  %v183 = vpop.xlane.xlu0 %182
  %v184 = vsel %vm168, %v180, 0.0
  %185 = vadd.xlane.f32.xlu0 %v184
  %v186 = vpop.xlane.xlu0 %185
  %v187 = vmul.f32 %v183, 8.0
  %v188 = vmul.f32 %v186, 8.0
  %v189 = vrcp.pop %v187
  %v190 = vmul.f32 1.0, %v189
  %v191 = vrcp.pop %v188
  %v192 = vmul.f32 1.0, %v191
  %vm193 = vcmask 64512
  %v195 = vsel %vm193, %v178, 0
  %197 = vmatprep.subr.mxu0 0.0
  %198 = vmatpush1.msra.mxu0 %v13
  %199 = vmatprep.subr.mxu0 0.0
  %200 = vmatpush1.msra.mxu0 0.0
  %201 = vmatprep.subr.mxu0 0.0
  %202 = vmatpush1.msra.mxu0 0.0
  %203 = vmatprep.subr.mxu0 0.0
  %204 = vmatpush1.msra.mxu0 0.0
  %205 = vmatprep.subr.mxu0 0.0
  %206 = vmatpush1.msra.mxu0 0.0
  %207 = vmatprep.subr.mxu0 0.0
  %208 = vmatpush1.msra.mxu0 0.0
  %209 = vmatprep.subr.mxu0 0.0
  %210 = vmatpush1.msra.mxu0 0.0
  %211 = vmatprep.subr.mxu0 0.0
  %212 = vmatpush1.msra.mxu0 0.0
  %213 = vmatprep.subr.mxu0 0.0
  %214 = vmatpush1.msra.mxu0 0.0
  %215 = vmatprep.subr.mxu0 0.0
  %216 = vmatpush1.msra.mxu0 0.0
  %217 = vmatprep.subr.mxu0 0.0
  %218 = vmatpush1.msra.mxu0 0.0
  %219 = vmatprep.subr.mxu0 0.0
  %220 = vmatpush1.msra.mxu0 0.0
  %221 = vmatprep.subr.mxu0 0.0
  %222 = vmatpush1.msra.mxu0 0.0
  %223 = vmatprep.subr.mxu0 0.0
  %224 = vmatpush1.msra.mxu0 0.0
  %225 = vmatprep.subr.mxu0 0.0
  %226 = vmatpush1.msra.mxu0 0.0
  %227 = vmatprep.subr.mxu0 0.0
  %228 = vmatpush1.msra.mxu0 0.0
  %229 = vmatprep.subr.mxu0 0.0
  %230 = vmatpush1.msra.mxu0 0.0
  %231 = vmatprep.subr.mxu0 0.0
  %232 = vmatpush1.msra.mxu0 0.0
  %233 = vmatprep.subr.mxu0 0.0
  %234 = vmatpush1.msra.mxu0 0.0
  %235 = vmatprep.subr.mxu0 0.0
  %236 = vmatpush1.msra.mxu0 0.0
  %237 = vmatprep.subr.mxu0 0.0
  %238 = vmatpush1.msra.mxu0 0.0
  %239 = vmatprep.subr.mxu0 0.0
  %240 = vmatpush1.msra.mxu0 0.0
  %241 = vmatprep.subr.mxu0 0.0
  %242 = vmatpush1.msra.mxu0 0.0
  %243 = vmatprep.subr.mxu0 0.0
  %244 = vmatpush1.msra.mxu0 0.0
  %245 = vmatprep.subr.mxu0 0.0
  %246 = vmatpush1.msra.mxu0 0.0
  %247 = vmatprep.subr.mxu0 0.0
  %248 = vmatpush1.msra.mxu0 0.0
  %249 = vmatprep.subr.mxu0 0.0
  %250 = vmatpush1.msra.mxu0 0.0
  %251 = vmatprep.subr.mxu0 0.0
  %252 = vmatpush1.msra.mxu0 0.0
  %253 = vmatprep.subr.mxu0 0.0
  %254 = vmatpush1.msra.mxu0 0.0
  %255 = vmatprep.subr.mxu0 0.0
  %256 = vmatpush1.msra.mxu0 0.0
  %257 = vmatprep.subr.mxu0 0.0
  %258 = vmatpush1.msra.mxu0 0.0
  %259 = vmatprep.subr.mxu0 0.0
  %260 = vmatpush1.msra.mxu0 0.0
  %261 = vmatprep.mubr.f32.mxu0 0.0
  %262 = vmatmul.mubr.f32.gmra.mrb[0].mxu0 %v195
  %v263 = vpop.f32.mrb[0].mxu0
  %v264 = vadd.f32 0.0, %v263
  %v265 = vpop.f32.mrb[0].mxu0
  %266 = vdwg.mxu0
  %v268 = vsel %vm193, %v180, 0
  %270 = vmatprep.subr.mxu0 0.0
  %271 = vmatpush1.msra.mxu0 %v14
  %272 = vmatprep.subr.mxu0 0.0
  %273 = vmatpush1.msra.mxu0 0.0
  %274 = vmatprep.subr.mxu0 0.0
  %275 = vmatpush1.msra.mxu0 0.0
  %276 = vmatprep.subr.mxu0 0.0
  %277 = vmatpush1.msra.mxu0 0.0
  %278 = vmatprep.subr.mxu0 0.0
  %279 = vmatpush1.msra.mxu0 0.0
  %280 = vmatprep.subr.mxu0 0.0
  %281 = vmatpush1.msra.mxu0 0.0
  %282 = vmatprep.subr.mxu0 0.0
  %283 = vmatpush1.msra.mxu0 0.0
  %284 = vmatprep.subr.mxu0 0.0
  %285 = vmatpush1.msra.mxu0 0.0
  %286 = vmatprep.subr.mxu0 0.0
  %287 = vmatpush1.msra.mxu0 0.0
  %288 = vmatprep.subr.mxu0 0.0
  %289 = vmatpush1.msra.mxu0 0.0
  %290 = vmatprep.subr.mxu0 0.0
  %291 = vmatpush1.msra.mxu0 0.0
  %292 = vmatprep.subr.mxu0 0.0
  %293 = vmatpush1.msra.mxu0 0.0
  %294 = vmatprep.subr.mxu0 0.0
  %295 = vmatpush1.msra.mxu0 0.0
  %296 = vmatprep.subr.mxu0 0.0
  %297 = vmatpush1.msra.mxu0 0.0
  %298 = vmatprep.subr.mxu0 0.0
  %299 = vmatpush1.msra.mxu0 0.0
  %300 = vmatprep.subr.mxu0 0.0
  %301 = vmatpush1.msra.mxu0 0.0
  %302 = vmatprep.subr.mxu0 0.0
  %303 = vmatpush1.msra.mxu0 0.0
  %304 = vmatprep.subr.mxu0 0.0
  %305 = vmatpush1.msra.mxu0 0.0
  %306 = vmatprep.subr.mxu0 0.0
  %307 = vmatpush1.msra.mxu0 0.0
  %308 = vmatprep.subr.mxu0 0.0
  %309 = vmatpush1.msra.mxu0 0.0
  %310 = vmatprep.subr.mxu0 0.0
  %311 = vmatpush1.msra.mxu0 0.0
  %312 = vmatprep.subr.mxu0 0.0
  %313 = vmatpush1.msra.mxu0 0.0
  %314 = vmatprep.subr.mxu0 0.0
  %315 = vmatpush1.msra.mxu0 0.0
  %316 = vmatprep.subr.mxu0 0.0
  %317 = vmatpush1.msra.mxu0 0.0
  %318 = vmatprep.subr.mxu0 0.0
  %319 = vmatpush1.msra.mxu0 0.0
  %320 = vmatprep.subr.mxu0 0.0
  %321 = vmatpush1.msra.mxu0 0.0
  %322 = vmatprep.subr.mxu0 0.0
  %323 = vmatpush1.msra.mxu0 0.0
  %324 = vmatprep.subr.mxu0 0.0
  %325 = vmatpush1.msra.mxu0 0.0
  %326 = vmatprep.subr.mxu0 0.0
  %327 = vmatpush1.msra.mxu0 0.0
  %328 = vmatprep.subr.mxu0 0.0
  %329 = vmatpush1.msra.mxu0 0.0
  %330 = vmatprep.subr.mxu0 0.0
  %331 = vmatpush1.msra.mxu0 0.0
  %332 = vmatprep.subr.mxu0 0.0
  %333 = vmatpush1.msra.mxu0 0.0
  %334 = vmatprep.mubr.f32.mxu0 0.0
  %335 = vmatmul.mubr.f32.gmra.mrb[0].mxu0 %v268
  %v336 = vpop.f32.mrb[0].mxu0
  %v337 = vadd.f32 0.0, %v336
  %v338 = vpop.f32.mrb[0].mxu0
  %339 = vdwg.mxu0
  %v340 = vmul.f32 %v264, %v190
  %v341 = vmul.f32 %v337, %v192
  %vm342 = vcmask 259072
  %343 = vst.msk [vmem:[%s2] sm:$0x3f] %vm342, %v340
  %344 = vst.msk [vmem:[%s2 + $0x8] sm:$0x3f] %vm342, %v341
  // Predicated region
  $region10: #{tpu_custom_call.1} parent=0 // pred_check
    _
  $region11: #{tpu_custom_call.1} parent=0 // pred_check_branch
    %346 = sbr.rel (0) target = $region13
  $region12: #{tpu_custom_call.1} parent=0 // pred_region
    _
  $region13: #{tpu_custom_call.1} parent=0 // pred_fallthru
    _
  // Predicated region
  $region14: #{tpu_custom_call.1} parent=0 // pred_check
    _
  $region15: #{tpu_custom_call.1} parent=0 // pred_check_branch
    %348 = sbr.rel (0) target = $region17
  $region16: #{tpu_custom_call.1} parent=0 // pred_region
    _
  $region17: #{tpu_custom_call.1} parent=0 // pred_fallthru
    _

</llo_original>
